<compile_context>
chip_gen: v7x
topology: tpu7x:2x2x1
jax: 0.10.0
libtpu: 0.0.40
codegen_flags: <defaults>
</compile_context>

<pallas_src>
import jax
import jax.numpy as jnp
from jax.experimental import pallas as pl
from jax.experimental.pallas import tpu as pltpu


# ----------------------------------------------------------------------------
# Fused Pallas kernel
# ----------------------------------------------------------------------------
def _rgbd_fusion_kernel(rgb_ref, depth_ref, wq_ref, wk_ref, wv_ref, o_ref):
    rgb = rgb_ref[0]        # (C, HW) f32, lane axis = HW
    depth = depth_ref[0]    # (C, HW) f32

    # AdaptiveAvgPool2d((1, 1)) == mean over the spatial (lane) axis.
    rgb_pool = jnp.mean(rgb, axis=1, keepdims=True)        # (C, 1)
    depth_pool = jnp.mean(depth, axis=1, keepdims=True)    # (C, 1)

    # mean(W @ X) == W @ mean(X): tiny (C,C)@(C,1) projections on the pooled
    # vectors replace two full-size (C,C)@(C,HW) matmuls.
    q_pool = jnp.dot(wq_ref[...], rgb_pool,
                     preferred_element_type=jnp.float32)   # (C, 1)
    k_pool = jnp.dot(wk_ref[...], depth_pool,
                     preferred_element_type=jnp.float32)   # (C, 1)

    # softmax over the channel axis (PyTorch dim=1 of the (B, C, 1, 1) pools).
    logits = q_pool * k_pool                               # (C, 1)
    m = jnp.max(logits, axis=0, keepdims=True)
    e = jnp.exp(logits - m)
    attn = e / jnp.sum(e, axis=0, keepdims=True)           # (C, 1)

    # Fold the per-output-channel attention weight into Wv:
    #   (Wv @ rgb) * attn == (attn * Wv) @ rgb
    # so the scaling is done on the tiny (C, C) tile, not the (C, HW) result.
    wv_scaled = attn * wv_ref[...]                         # (C, C)
    v_attn = jnp.dot(wv_scaled, rgb,
                     preferred_element_type=jnp.float32)   # (C, HW)

    # Residual.
    o_ref[0] = rgb + v_attn


def rgbd_attention_fusion_block(rgb_nchw, depth_nchw, wq, wk, wv):
    """rgb/depth: (B, C, H, W) f32; wq/wk/wv: (Cout, Cin) = (C, C) f32."""
    assert rgb_nchw.shape == depth_nchw.shape, (
        f"rgb.shape={rgb_nchw.shape} depth.shape={depth_nchw.shape}")
    B, C, H, W = rgb_nchw.shape
    HW = H * W

    # NCHW is already (B, C, H*W) in memory -> reshape only, no transposes.
    rgb = rgb_nchw.reshape(B, C, HW)
    depth = depth_nchw.reshape(B, C, HW)

    cost = pl.CostEstimate(
        flops=int(2 * B * C * C * HW      # value projection
                  + 2 * 2 * B * C * C     # pooled q/k projections
                  + 4 * B * C * HW),      # pooling + residual
        transcendentals=int(B * C),       # softmax exp
        bytes_accessed=int(4 * (3 * B * C * HW + 3 * C * C)),
    )

    out = pl.pallas_call(
        _rgbd_fusion_kernel,
        out_shape=jax.ShapeDtypeStruct((B, C, HW), jnp.float32),
        grid=(B,),
        in_specs=[
            pl.BlockSpec((1, C, HW), lambda b: (b, 0, 0)),   # rgb
            pl.BlockSpec((1, C, HW), lambda b: (b, 0, 0)),   # depth
            pl.BlockSpec((C, C), lambda b: (0, 0)),          # Wq (resident)
            pl.BlockSpec((C, C), lambda b: (0, 0)),          # Wk (resident)
            pl.BlockSpec((C, C), lambda b: (0, 0)),          # Wv (resident)
        ],
        out_specs=pl.BlockSpec((1, C, HW), lambda b: (b, 0, 0)),
        compiler_params=pltpu.CompilerParams(
            dimension_semantics=("parallel",),
            vmem_limit_bytes=32 * 1024 * 1024,
        ),
        cost_estimate=cost,
    )(rgb, depth, wq, wk, wv)

    return out.reshape(B, C, H, W)


# ----------------------------------------------------------------------------
# Pure-JAX reference (correctness check only)
# ----------------------------------------------------------------------------
def ref_forward(rgb, depth, wq, wk, wv):
    hp = jax.lax.Precision.HIGHEST

    def conv1x1(x, w):  # w: (Cout, Cin); x: (B, C, H, W)
        return jnp.einsum("oc,bchw->bohw", w, x, precision=hp)

    q = conv1x1(rgb, wq)
    k = conv1x1(depth, wk)
    v = conv1x1(rgb, wv)
    q_pool = jnp.mean(q, axis=(2, 3), keepdims=True)
    k_pool = jnp.mean(k, axis=(2, 3), keepdims=True)
    attn = jax.nn.softmax(q_pool * k_pool, axis=1)
    return rgb + v * attn


if __name__ == "__main__":
    key = jax.random.PRNGKey(0)
    k_rgb, k_d, kq, kk, kv = jax.random.split(key, 5)

    B, C, H, W = 2, 32, 16, 16
    rgb = jax.random.normal(k_rgb, (B, C, H, W), jnp.float32)
    depth = jax.random.normal(k_d, (B, C, H, W), jnp.float32)

    def conv_w(k):
        # nn.Conv2d(C, C, (1, 1), bias=False).weight squeezed to (Cout, Cin).
        return (jax.random.normal(k, (C, C), jnp.float32)
                / jnp.sqrt(jnp.float32(C)))

    wq, wk, wv = conv_w(kq), conv_w(kk), conv_w(kv)

    out = rgbd_attention_fusion_block(rgb, depth, wq, wk, wv)
    jax.block_until_ready(out)

    ref = ref_forward(rgb, depth, wq, wk, wv)
    assert out.shape == (B, C, H, W)
    assert jnp.allclose(out, ref, atol=1e-2, rtol=1e-2), float(
        jnp.max(jnp.abs(out - ref)))

    print("KERNEL_OK")
</pallas_src>

<mosaic_0001>
module attributes {stable_mosaic.version = 11 : i64} {
  func.func @_rgbd_fusion_kernel(%arg0: i32, %arg1: memref<1x32x256xf32, #tpu.memory_space<vmem>>, %arg2: memref<1x32x256xf32, #tpu.memory_space<vmem>>, %arg3: memref<32x32xf32, #tpu.memory_space<vmem>>, %arg4: memref<32x32xf32, #tpu.memory_space<vmem>>, %arg5: memref<32x32xf32, #tpu.memory_space<vmem>>, %arg6: memref<1x32x256xf32, #tpu.memory_space<vmem>>) attributes {dimension_semantics = [#tpu.dimension_semantics<parallel>], iteration_bounds = array<i64: 2>, scalar_prefetch = 0 : i64, scratch_operands = 0 : i64, tpu.core_type = #tpu.core_type<tc>, window_params = [{transform_indices = @transform_0, window_bounds = array<i64: 1, 32, 256>}, {transform_indices = @transform_1, window_bounds = array<i64: 1, 32, 256>}, {pipeline_mode = #tpu.pipeline_mode<synchronous>, transform_indices = @transform_2, window_bounds = array<i64: 32, 32>}, {pipeline_mode = #tpu.pipeline_mode<synchronous>, transform_indices = @transform_3, window_bounds = array<i64: 32, 32>}, {pipeline_mode = #tpu.pipeline_mode<synchronous>, transform_indices = @transform_4, window_bounds = array<i64: 32, 32>}, {transform_indices = @transform_5, window_bounds = array<i64: 1, 32, 256>}]} {
    %c0 = arith.constant 0 : index
    %c0_0 = arith.constant 0 : index
    %c0_1 = arith.constant 0 : index
    %0 = vector.load %arg1[%c0, %c0_0, %c0_1] : memref<1x32x256xf32, #tpu.memory_space<vmem>>, vector<1x32x256xf32>
    %1 = vector.shape_cast %0 : vector<1x32x256xf32> to vector<32x256xf32>
    %c0_2 = arith.constant 0 : index
    %c0_3 = arith.constant 0 : index
    %c0_4 = arith.constant 0 : index
    %2 = vector.load %arg2[%c0_2, %c0_3, %c0_4] : memref<1x32x256xf32, #tpu.memory_space<vmem>>, vector<1x32x256xf32>
    %3 = vector.shape_cast %2 : vector<1x32x256xf32> to vector<32x256xf32>
    %cst = arith.constant dense<0.000000e+00> : vector<32xf32>
    %4 = vector.multi_reduction <add>, %1, %cst [1] : vector<32x256xf32> to vector<32xf32>
    %5 = vector.shape_cast %4 : vector<32xf32> to vector<32x1xf32>
    %cst_5 = arith.constant 2.560000e+02 : f32
    %6 = vector.broadcast %cst_5 : f32 to vector<32x1xf32>
    %7 = arith.divf %5, %6 : vector<32x1xf32>
    %cst_6 = arith.constant dense<0.000000e+00> : vector<32xf32>
    %8 = vector.multi_reduction <add>, %3, %cst_6 [1] : vector<32x256xf32> to vector<32xf32>
    %9 = vector.shape_cast %8 : vector<32xf32> to vector<32x1xf32>
    %cst_7 = arith.constant 2.560000e+02 : f32
    %10 = vector.broadcast %cst_7 : f32 to vector<32x1xf32>
    %11 = arith.divf %9, %10 : vector<32x1xf32>
    %c0_8 = arith.constant 0 : index
    %c0_9 = arith.constant 0 : index
    %12 = vector.load %arg3[%c0_8, %c0_9] : memref<32x32xf32, #tpu.memory_space<vmem>>, vector<32x32xf32>
    %cst_10 = arith.constant dense<0.000000e+00> : vector<32x1xf32>
    %13 = tpu.matmul %12, %7, %cst_10 {dimension_numbers = #tpu.dot_dimension_numbers<[1], [0], [0], [1], [0, 0, 1, 1], [], []>} : vector<32x32xf32>, vector<32x1xf32>, vector<32x1xf32> -> vector<32x1xf32>
    %c0_11 = arith.constant 0 : index
    %c0_12 = arith.constant 0 : index
    %14 = vector.load %arg4[%c0_11, %c0_12] : memref<32x32xf32, #tpu.memory_space<vmem>>, vector<32x32xf32>
    %cst_13 = arith.constant dense<0.000000e+00> : vector<32x1xf32>
    %15 = tpu.matmul %14, %11, %cst_13 {dimension_numbers = #tpu.dot_dimension_numbers<[1], [0], [0], [1], [0, 0, 1, 1], [], []>} : vector<32x32xf32>, vector<32x1xf32>, vector<32x1xf32> -> vector<32x1xf32>
    %16 = arith.mulf %13, %15 : vector<32x1xf32>
    %cst_14 = arith.constant dense<0xFF800000> : vector<1xf32>
    %17 = vector.multi_reduction <maximumf>, %16, %cst_14 [0] : vector<32x1xf32> to vector<1xf32>
    %18 = vector.shape_cast %17 : vector<1xf32> to vector<1x1xf32>
    %19 = vector.broadcast %18 : vector<1x1xf32> to vector<32x1xf32>
    %20 = arith.subf %16, %19 : vector<32x1xf32>
    %21 = math.exp %20 : vector<32x1xf32>
    %cst_15 = arith.constant dense<0.000000e+00> : vector<1xf32>
    %22 = vector.multi_reduction <add>, %21, %cst_15 [0] : vector<32x1xf32> to vector<1xf32>
    %23 = vector.shape_cast %22 : vector<1xf32> to vector<1x1xf32>
    %24 = vector.broadcast %23 : vector<1x1xf32> to vector<32x1xf32>
    %25 = arith.divf %21, %24 : vector<32x1xf32>
    %c0_16 = arith.constant 0 : index
    %c0_17 = arith.constant 0 : index
    %26 = vector.load %arg5[%c0_16, %c0_17] : memref<32x32xf32, #tpu.memory_space<vmem>>, vector<32x32xf32>
    %27 = vector.broadcast %25 : vector<32x1xf32> to vector<32x32xf32>
    %28 = arith.mulf %27, %26 : vector<32x32xf32>
    %cst_18 = arith.constant dense<0.000000e+00> : vector<32x256xf32>
    %29 = tpu.matmul %28, %1, %cst_18 {dimension_numbers = #tpu.dot_dimension_numbers<[1], [0], [0], [1], [0, 0, 1, 1], [], []>} : vector<32x32xf32>, vector<32x256xf32>, vector<32x256xf32> -> vector<32x256xf32>
    %30 = arith.addf %1, %29 : vector<32x256xf32>
    %c0_19 = arith.constant 0 : index
    %c0_20 = arith.constant 0 : index
    %c0_21 = arith.constant 0 : index
    %31 = vector.load %arg6[%c0_19, %c0_20, %c0_21] : memref<1x32x256xf32, #tpu.memory_space<vmem>>, vector<1x32x256xf32>
    %32 = vector.shape_cast %31 : vector<1x32x256xf32> to vector<32x256xf32>
    %33 = vector.shape_cast %30 : vector<32x256xf32> to vector<1x32x256xf32>
    tpu.vector_store %arg6[%c0_19, %c0_20, %c0_21], %33 {strides = array<i32>} : memref<1x32x256xf32, #tpu.memory_space<vmem>>, vector<1x32x256xf32>,
    return
  }
  func.func @transform_0(%arg0: i32) -> (i32, i32, i32) {
    %c0_i32 = arith.constant 0 : i32
    %c0_i32_0 = arith.constant 0 : i32
    %c0_i32_1 = arith.constant 0 : i32
    return %arg0, %c0_i32, %c0_i32_0 : i32, i32, i32
  }
  func.func @transform_1(%arg0: i32) -> (i32, i32, i32) {
    %c0_i32 = arith.constant 0 : i32
    %c0_i32_0 = arith.constant 0 : i32
    %c0_i32_1 = arith.constant 0 : i32
    return %arg0, %c0_i32, %c0_i32_0 : i32, i32, i32
  }
  func.func @transform_2(%arg0: i32) -> (i32, i32) {
    %c0_i32 = arith.constant 0 : i32
    %c0_i32_0 = arith.constant 0 : i32
    %c0_i32_1 = arith.constant 0 : i32
    return %c0_i32, %c0_i32_0 : i32, i32
  }
  func.func @transform_3(%arg0: i32) -> (i32, i32) {
    %c0_i32 = arith.constant 0 : i32
    %c0_i32_0 = arith.constant 0 : i32
    %c0_i32_1 = arith.constant 0 : i32
    return %c0_i32, %c0_i32_0 : i32, i32
  }
  func.func @transform_4(%arg0: i32) -> (i32, i32) {
    %c0_i32 = arith.constant 0 : i32
    %c0_i32_0 = arith.constant 0 : i32
    %c0_i32_1 = arith.constant 0 : i32
    return %c0_i32, %c0_i32_0 : i32, i32
  }
  func.func @transform_5(%arg0: i32) -> (i32, i32, i32) {
    %c0_i32 = arith.constant 0 : i32
    %c0_i32_0 = arith.constant 0 : i32
    %c0_i32_1 = arith.constant 0 : i32
    return %arg0, %c0_i32, %c0_i32_0 : i32, i32, i32
  }
}

</mosaic_0001>

<llo_original>
// kernel: tpu_custom_call.1
$region0: #{tpu_custom_call.1}
  #allocation0 [shape = 'u32[]', space=smem, size = 0x4, offset = 0x4, fixed_abs, tag = 'smem constant byte address 0x4 - core index']
  #allocation1 [shape = 'u32[144,128]{1,0:T(1,128)}', space=vmem, size = 0x12000, scoped, tag = 'internal scratch']
  %s0 = inlined_call_operand.hbm [shape: f32[2,32,256], index: 0, kind: input, shape index: {}]
  %s1 = inlined_call_operand.hbm [shape: f32[2,32,256], index: 1, kind: input, shape index: {}]
  %s2 = inlined_call_operand.hbm [shape: f32[32,32], index: 2, kind: input, shape index: {}]
  %s3 = inlined_call_operand.hbm [shape: f32[32,32], index: 3, kind: input, shape index: {}]
  %s4 = inlined_call_operand.hbm [shape: f32[32,32], index: 4, kind: input, shape index: {}]
  %s5 = inlined_call_operand.hbm [shape: f32[2,32,256], index: 5, kind: output, shape index: {}]
  %s6 = sld [smem:[#allocation0]]
  $region73: #{tpu_custom_call.1} parent=0
    _
  %s8 = ssub.s32 1, %s6
  %s9 = scalar_select 0, %s8, %s6
  $region1: #{tpu_custom_call.1} parent=0
    #allocation2 [shape = 'u8[65536]{0}', space=vmem, size = 0x10000, scoped, tag = 'input window, operand 0']
    #allocation3 [shape = 's32[2]{0}', space=sflag, size = 0x8, scoped, tag = 'scoped memory for tpu_custom_call.1']
    #allocation4 [shape = 's32[2]{0}', space=sflag, size = 0x8, scoped, tag = 'scoped memory for tpu_custom_call.1']
    #allocation5 [shape = 'u8[65536]{0}', space=vmem, size = 0x10000, scoped, tag = 'input window, operand 1']
    #allocation6 [shape = 's32[2]{0}', space=sflag, size = 0x8, scoped, tag = 'scoped memory for tpu_custom_call.1']
    #allocation7 [shape = 'u8[16384]{0}', space=vmem, size = 0x4000, scoped, tag = 'input window, operand 2, single buffered']
    #allocation8 [shape = 'u8[16384]{0}', space=vmem, size = 0x4000, scoped, tag = 'input window, operand 3, single buffered']
    #allocation9 [shape = 's32[1]{0}', space=sflag, size = 0x4, scoped, tag = 'scoped memory for tpu_custom_call.1']
    #allocation10 [shape = 'u8[16384]{0}', space=vmem, size = 0x4000, scoped, tag = 'input window, operand 4, single buffered']
    #allocation11 [shape = 'u8[65536]{0}', space=vmem, size = 0x10000, scoped, tag = 'output window, operand 0']
    %10 = vsyncpa [#allocation3], 0
    %s11 = scalar_lea.sflag [#allocation3], 1
    %12 = vsyncpa %s11, 0
    %13 = vsyncpa [#allocation6], 0
    %s14 = scalar_lea.sflag [#allocation6], 1
    %15 = vsyncpa %s14, 0
    %16 = vsyncpa [#allocation9], 0
    %17 = vsyncpa [#allocation4], 0
    %s18 = scalar_lea.sflag [#allocation4], 1
    %19 = vsyncpa %s18, 0
    loop: start=0, step=1, limit=4
    $region2: #{tpu_custom_call.1} parent=1 // loop_pre_header
      _
    $region3: #{tpu_custom_call.1} parent=1 // loop_header
      %s21 = sphi 0, %s25
      %p22 = scmp.ge.s32.totalorder %s21, 4
      %s31 = sphi 0, %s33
      %s34 = sphi 0, %s31
      %s35 = sphi 0, %s34
      %s51 = sphi 0, %s35
      %s57 = sphi 0, %s59
      %s60 = sphi 0, %s57
      %s61 = sphi 0, %s60
      %s77 = sphi 0, %s61
      %s81 = sphi 0, %s81
      %s83 = sphi 0, %s81
      %s84 = sphi 0, %s83
      %s98 = sphi 0, %s84
      %s102 = sphi 0, %s102
      %s104 = sphi 0, %s102
      %s105 = sphi 0, %s104
      %s119 = sphi 0, %s105
      %s123 = sphi 0, %s123
      %s125 = sphi 0, %s123
      %s126 = sphi 0, %s125
      %s140 = sphi 0, %s126
      %s146 = sphi 0, %s148
      %s149 = sphi 0, %s146
      %s150 = sphi 0, %s149
      %s166 = sphi 0, %s150
    $region4: #{tpu_custom_call.1} parent=1 // loop_header_branch
      %24 = sbr.rel (%p22) target = $region8
    $region5: #{tpu_custom_call.1} parent=1 // loop_body
      %s26 = ssub.s32 %s21, 1
      %s27 = ssub.s32 %s21, 2
      %s28 = sadd.s32 %s21, 1
      %s29 = ssub.s32 %s21, %s28
      %p30 = scmp.eq.s32.totalorder %s29, 0
      %s32 = sadd.s32 %s31, 1
      %s33 = scalar_select %p30, %s31, %s32
      %p36 = pneg %p30
      %p37 = scmp.eq.s32.totalorder %s21, 1
      %p38 = por %p36, %p37
      %p39 = scmp.ne.s32.totalorder %s31, %s34
      %p40 = scmp.eq.s32.totalorder %s21, 0
      %p41 = por %p39, %p40
      %p42 = scmp.ne.s32.totalorder %s31, %s34
      %p43 = scmp.eq.s32.totalorder %s26, 1
      %p44 = por %p42, %p43
      %p45 = scmp.ne.s32.totalorder %s34, %s35
      %p46 = scmp.eq.s32.totalorder %s26, 0
      %p47 = por %p45, %p46
      %p48 = scmp.ne.s32.totalorder %s34, %s35
      %p49 = scmp.eq.s32.totalorder %s27, 1
      %p50 = por %p48, %p49
      %p52 = scmp.ne.s32.totalorder %s35, %s51
      %p53 = scmp.eq.s32.totalorder %s27, 0
      %p54 = por %p52, %p53
      %s55 = ssub.s32 %s21, %s28
      %p56 = scmp.eq.s32.totalorder %s55, 0
      %s58 = sadd.s32 %s57, 1
      %s59 = scalar_select %p56, %s57, %s58
      %p62 = pneg %p56
      %p63 = scmp.eq.s32.totalorder %s21, 1
      %p64 = por %p62, %p63
      %p65 = scmp.ne.s32.totalorder %s57, %s60
      %p66 = scmp.eq.s32.totalorder %s21, 0
      %p67 = por %p65, %p66
      %p68 = scmp.ne.s32.totalorder %s57, %s60
      %p69 = scmp.eq.s32.totalorder %s26, 1
      %p70 = por %p68, %p69
      %p71 = scmp.ne.s32.totalorder %s60, %s61
      %p72 = scmp.eq.s32.totalorder %s26, 0
      %p73 = por %p71, %p72
      %p74 = scmp.ne.s32.totalorder %s60, %s61
      %p75 = scmp.eq.s32.totalorder %s27, 1
      %p76 = por %p74, %p75
      %p78 = scmp.ne.s32.totalorder %s61, %s77
      %p79 = scmp.eq.s32.totalorder %s27, 0
      %p80 = por %p78, %p79
      %s82 = sadd.s32 %s81, 1
      %p85 = scmp.eq.s32.totalorder %s21, 1
      %p86 = scmp.ne.s32.totalorder %s81, %s83
      %p87 = scmp.eq.s32.totalorder %s21, 0
      %p88 = por %p86, %p87
      %p89 = scmp.ne.s32.totalorder %s81, %s83
      %p90 = scmp.eq.s32.totalorder %s26, 1
      %p91 = por %p89, %p90
      %p92 = scmp.ne.s32.totalorder %s83, %s84
      %p93 = scmp.eq.s32.totalorder %s26, 0
      %p94 = por %p92, %p93
      %p95 = scmp.ne.s32.totalorder %s83, %s84
      %p96 = scmp.eq.s32.totalorder %s27, 1
      %p97 = por %p95, %p96
      %p99 = scmp.ne.s32.totalorder %s84, %s98
      %p100 = scmp.eq.s32.totalorder %s27, 0
      %p101 = por %p99, %p100
      %s103 = sadd.s32 %s102, 1
      %p106 = scmp.eq.s32.totalorder %s21, 1
      %p107 = scmp.ne.s32.totalorder %s102, %s104
      %p108 = scmp.eq.s32.totalorder %s21, 0
      %p109 = por %p107, %p108
      %p110 = scmp.ne.s32.totalorder %s102, %s104
      %p111 = scmp.eq.s32.totalorder %s26, 1
      %p112 = por %p110, %p111
      %p113 = scmp.ne.s32.totalorder %s104, %s105
      %p114 = scmp.eq.s32.totalorder %s26, 0
      %p115 = por %p113, %p114
      %p116 = scmp.ne.s32.totalorder %s104, %s105
      %p117 = scmp.eq.s32.totalorder %s27, 1
      %p118 = por %p116, %p117
      %p120 = scmp.ne.s32.totalorder %s105, %s119
      %p121 = scmp.eq.s32.totalorder %s27, 0
      %p122 = por %p120, %p121
      %s124 = sadd.s32 %s123, 1
      %p127 = scmp.eq.s32.totalorder %s21, 1
      %p128 = scmp.ne.s32.totalorder %s123, %s125
      %p129 = scmp.eq.s32.totalorder %s21, 0
      %p130 = por %p128, %p129
      %p131 = scmp.ne.s32.totalorder %s123, %s125
      %p132 = scmp.eq.s32.totalorder %s26, 1
      %p133 = por %p131, %p132
      %p134 = scmp.ne.s32.totalorder %s125, %s126
      %p135 = scmp.eq.s32.totalorder %s26, 0
      %p136 = por %p134, %p135
      %p137 = scmp.ne.s32.totalorder %s125, %s126
      %p138 = scmp.eq.s32.totalorder %s27, 1
      %p139 = por %p137, %p138
      %p141 = scmp.ne.s32.totalorder %s126, %s140
      %p142 = scmp.eq.s32.totalorder %s27, 0
      %p143 = por %p141, %p142
      %s144 = ssub.s32 %s21, %s28
      %p145 = scmp.eq.s32.totalorder %s144, 0
      %s147 = sadd.s32 %s146, 1
      %s148 = scalar_select %p145, %s146, %s147
      %p151 = pneg %p145
      %p152 = scmp.eq.s32.totalorder %s21, 1
      %p153 = por %p151, %p152
      %p154 = scmp.ne.s32.totalorder %s146, %s149
      %p155 = scmp.eq.s32.totalorder %s21, 0
      %p156 = por %p154, %p155
      %p157 = scmp.ne.s32.totalorder %s146, %s149
      %p158 = scmp.eq.s32.totalorder %s26, 1
      %p159 = por %p157, %p158
      %p160 = scmp.ne.s32.totalorder %s149, %s150
      %p161 = scmp.eq.s32.totalorder %s26, 0
      %p162 = por %p160, %p161
      %p163 = scmp.ne.s32.totalorder %s149, %s150
      %p164 = scmp.eq.s32.totalorder %s27, 1
      %p165 = por %p163, %p164
      %p167 = scmp.ne.s32.totalorder %s150, %s166
      %p168 = scmp.eq.s32.totalorder %s27, 0
      %p169 = por %p167, %p168
      %p170 = scmp.le.s32.totalorder 1, %s21
      %p171 = scmp.lt.s32.totalorder %s21, 3
      %p172 = pnand %p170, %p171
      %p173 = pneg %p172
      // Predicated region
      $region9: #{tpu_custom_call.1} parent=5 // pred_check
        _
      $region10: #{tpu_custom_call.1} parent=5 // pred_check_branch
        %175 = sbr.rel (%p172) target = $region12
      $region11: #{tpu_custom_call.1} parent=5 // pred_region
        %s176 = ssub.s32 %s21, 1
        // Predicated region
        $region13: #{tpu_custom_call.1} parent=11 // pred_check
          %p177 = pneg %p94
        $region14: #{tpu_custom_call.1} parent=11 // pred_check_branch
          %179 = sbr.rel (%p177) target = $region16
        $region15: #{tpu_custom_call.1} parent=11 // pred_region
          %s181 = ssub.s32 512, 512
          %182 = vsyncadd [#allocation6], %s181
          %s183 = sshll.u32 [#allocation7], 4
          %s184 = int_to_ptr.vmem [resolvable:$true] %s183
          %189 = dma.hbm_to_vmem [thread:$0]  %s2, 512, %s184, [#allocation6], 128, 128, 8
        $region16: #{tpu_custom_call.1} parent=11 // pred_fallthru
          _
        // Predicated region
        $region17: #{tpu_custom_call.1} parent=11 // pred_check
          %p190 = pneg %p115
        $region18: #{tpu_custom_call.1} parent=11 // pred_check_branch
          %192 = sbr.rel (%p190) target = $region20
        $region19: #{tpu_custom_call.1} parent=11 // pred_region
          %s194 = ssub.s32 512, 512
          %195 = vsyncadd [#allocation9], %s194
          %s196 = sshll.u32 [#allocation8], 4
          %s197 = int_to_ptr.vmem [resolvable:$true] %s196
          %202 = dma.hbm_to_vmem [thread:$0]  %s3, 512, %s197, [#allocation9], 128, 128, 8
        $region20: #{tpu_custom_call.1} parent=11 // pred_fallthru
          _
        // Predicated region
        $region21: #{tpu_custom_call.1} parent=11 // pred_check
          %p203 = pneg %p136
        $region22: #{tpu_custom_call.1} parent=11 // pred_check_branch
          %205 = sbr.rel (%p203) target = $region24
        $region23: #{tpu_custom_call.1} parent=11 // pred_region
          %s207 = ssub.s32 512, 512
          %208 = vsyncadd [#allocation9], %s207
          %s209 = sshll.u32 [#allocation10], 4
          %s210 = int_to_ptr.vmem [resolvable:$true] %s209
          %215 = dma.hbm_to_vmem [thread:$0]  %s4, 512, %s210, [#allocation9], 128, 128, 8
        $region24: #{tpu_custom_call.1} parent=11 // pred_fallthru
          _
      $region12: #{tpu_custom_call.1} parent=5 // pred_fallthru
        _
      %p216 = scmp.lt.s32.totalorder %s21, 2
      // Predicated region
      $region25: #{tpu_custom_call.1} parent=5 // pred_check
        %p217 = pneg %p216
      $region26: #{tpu_custom_call.1} parent=5 // pred_check_branch
        %219 = sbr.rel (%p217) target = $region28
      $region27: #{tpu_custom_call.1} parent=5 // pred_region
        // Predicated region
        $region29: #{tpu_custom_call.1} parent=27 // pred_check
          %p220 = pneg %p41
        $region30: #{tpu_custom_call.1} parent=27 // pred_check_branch
          %222 = sbr.rel (%p220) target = $region32
        $region31: #{tpu_custom_call.1} parent=27 // pred_region
          %s223 = sand.u32 %s31, 1
          %s224 = scalar_lea.sflag [#allocation3], %s223
          %s225 = sand.u32 %s31, 1
          %s226 = smul.addr %s225, 64
          %s227 = scalar_lea.vmem [#allocation2], %s226
          %s229 = ssub.s32 1024, 1024
          %230 = vsyncadd %s224, %s229
          %s231 = smul.addr %s21, 8
          %s232 = smul.addr %s231, 128
          %s233 = scalar_lea.hbm %s0, %s232
          %s234 = sshll.u32 %s227, 4
          %s235 = int_to_ptr.vmem [resolvable:$true] %s234
          %240 = dma.hbm_to_vmem [thread:$0]  %s233, 1024, %s235, %s224, 256, 256, 16
        $region32: #{tpu_custom_call.1} parent=27 // pred_fallthru
          _
        // Predicated region
        $region33: #{tpu_custom_call.1} parent=27 // pred_check
          %p241 = pneg %p67
        $region34: #{tpu_custom_call.1} parent=27 // pred_check_branch
          %243 = sbr.rel (%p241) target = $region36
        $region35: #{tpu_custom_call.1} parent=27 // pred_region
          %s244 = sand.u32 %s21, 1
          %s245 = scalar_lea.sflag [#allocation6], %s244
          %s246 = sand.u32 %s57, 1
          %s247 = smul.addr %s246, 64
          %s248 = scalar_lea.vmem [#allocation5], %s247
          %s250 = ssub.s32 1024, 1024
          %251 = vsyncadd %s245, %s250
          %s252 = smul.addr %s21, 8
          %s253 = smul.addr %s252, 128
          %s254 = scalar_lea.hbm %s1, %s253
          %s255 = sshll.u32 %s248, 4
          %s256 = int_to_ptr.vmem [resolvable:$true] %s255
          %261 = dma.hbm_to_vmem [thread:$0]  %s254, 1024, %s256, %s245, 256, 256, 16
        $region36: #{tpu_custom_call.1} parent=27 // pred_fallthru
          _
      $region28: #{tpu_custom_call.1} parent=5 // pred_fallthru
        _
      %p262 = scmp.le.s32.totalorder 1, %s21
      %p263 = scmp.lt.s32.totalorder %s21, 3
      %p264 = pnand %p262, %p263
      %p265 = pneg %p264
      // Predicated region
      $region37: #{tpu_custom_call.1} parent=5 // pred_check
        _
      $region38: #{tpu_custom_call.1} parent=5 // pred_check_branch
        %267 = sbr.rel (%p264) target = $region40
      $region39: #{tpu_custom_call.1} parent=5 // pred_region
        %s268 = ssub.s32 %s21, 1
        %s269 = sand.u32 %s34, 1
        %s270 = scalar_lea.sflag [#allocation3], %s269
        %s271 = sand.u32 %s34, 1
        %s272 = smul.addr %s271, 64
        %s273 = scalar_lea.vmem [#allocation2], %s272
        // Predicated region
        $region41: #{tpu_custom_call.1} parent=39 // pred_check
          %p274 = pneg %p47
        $region42: #{tpu_custom_call.1} parent=39 // pred_check_branch
          %276 = sbr.rel (%p274) target = $region44
        $region43: #{tpu_custom_call.1} parent=39 // pred_region
          %277 = dma.done %s270, 1024
        $region44: #{tpu_custom_call.1} parent=39 // pred_fallthru
          _
        %s278 = sand.u32 %s26, 1
        %s279 = scalar_lea.sflag [#allocation6], %s278
        %s280 = sand.u32 %s60, 1
        %s281 = smul.addr %s280, 64
        %s282 = scalar_lea.vmem [#allocation5], %s281
        // Predicated region
        $region45: #{tpu_custom_call.1} parent=39 // pred_check
          %p283 = pneg %p73
        $region46: #{tpu_custom_call.1} parent=39 // pred_check_branch
          %285 = sbr.rel (%p283) target = $region48
        $region47: #{tpu_custom_call.1} parent=39 // pred_region
          %286 = dma.done %s279, 1024
        $region48: #{tpu_custom_call.1} parent=39 // pred_fallthru
          _
        // Predicated region
        $region49: #{tpu_custom_call.1} parent=39 // pred_check
          %p287 = pneg %p94
        $region50: #{tpu_custom_call.1} parent=39 // pred_check_branch
          %289 = sbr.rel (%p287) target = $region52
        $region51: #{tpu_custom_call.1} parent=39 // pred_region
          %290 = dma.done [#allocation6], 512
        $region52: #{tpu_custom_call.1} parent=39 // pred_fallthru
          _
        // Predicated region
        $region53: #{tpu_custom_call.1} parent=39 // pred_check
          %p291 = pneg %p115
        $region54: #{tpu_custom_call.1} parent=39 // pred_check_branch
          %293 = sbr.rel (%p291) target = $region56
        $region55: #{tpu_custom_call.1} parent=39 // pred_region
          %294 = dma.done [#allocation9], 512
        $region56: #{tpu_custom_call.1} parent=39 // pred_fallthru
          _
        // Predicated region
        $region57: #{tpu_custom_call.1} parent=39 // pred_check
          %p295 = pneg %p136
        $region58: #{tpu_custom_call.1} parent=39 // pred_check_branch
          %297 = sbr.rel (%p295) target = $region60
        $region59: #{tpu_custom_call.1} parent=39 // pred_region
          %298 = dma.done [#allocation9], 512
        $region60: #{tpu_custom_call.1} parent=39 // pred_fallthru
          _
        %s299 = sand.u32 %s34, 1
        %s300 = scalar_lea.sflag [#allocation3], %s299
        %s301 = sand.u32 %s34, 1
        %s302 = smul.addr %s301, 64
        %s303 = scalar_lea.vmem [#allocation2], %s302
        %p304 = pneg %p47
        %p305 = pneg %p44
        %s306 = sand.u32 %s26, 1
        %s307 = scalar_lea.sflag [#allocation6], %s306
        %s308 = sand.u32 %s60, 1
        %s309 = smul.addr %s308, 64
        %s310 = scalar_lea.vmem [#allocation5], %s309
        %p311 = pneg %p73
        %p312 = pneg %p70
        %p313 = pneg %p94
        %p314 = pneg %p91
        %p315 = pneg %p115
        %p316 = pneg %p112
        %p317 = pneg %p136
        %p318 = pneg %p133
        %p319 = pneg %p162
        %p320 = pneg %p159
        %s321 = sand.u32 %s149, 1
        %s322 = scalar_lea.sflag [#allocation4], %s321
        %s323 = sand.u32 %s149, 1
        %s324 = smul.addr %s323, 64
        %s325 = scalar_lea.vmem [#allocation11], %s324
        %v326 = vld [vmem:[%s273] sm:$0xff]
        %v327 = vld [vmem:[%s273 + $0x8] sm:$0xff]
        %v328 = vld [vmem:[%s273 + $0x10] sm:$0xff]
        %v329 = vld [vmem:[%s273 + $0x18] sm:$0xff]
        %v330 = vld [vmem:[%s273 + $0x20] sm:$0xff]
        %v331 = vld [vmem:[%s273 + $0x28] sm:$0xff]
        %v332 = vld [vmem:[%s273 + $0x30] sm:$0xff]
        %v333 = vld [vmem:[%s273 + $0x38] sm:$0xff]
        %v334 = vld [vmem:[%s282] sm:$0xff]
        %v335 = vld [vmem:[%s282 + $0x8] sm:$0xff]
        %v336 = vld [vmem:[%s282 + $0x10] sm:$0xff]
        %v337 = vld [vmem:[%s282 + $0x18] sm:$0xff]
        %v338 = vld [vmem:[%s282 + $0x20] sm:$0xff]
        %v339 = vld [vmem:[%s282 + $0x28] sm:$0xff]
        %v340 = vld [vmem:[%s282 + $0x30] sm:$0xff]
        %v341 = vld [vmem:[%s282 + $0x38] sm:$0xff]
        %v342 = vadd.f32 %v326, %v327
        %343 = vadd.xlane.f32.xlu0 %v342
        %v344 = vpop.xlane.xlu0 %343
        %v345 = vadd.f32 %v328, %v329
        %346 = vadd.xlane.f32.xlu0 %v345
        %v347 = vpop.xlane.xlu0 %346
        %v348 = vadd.f32 %v330, %v331
        %349 = vadd.xlane.f32.xlu0 %v348
        %v350 = vpop.xlane.xlu0 %349
        %v351 = vadd.f32 %v332, %v333
        %352 = vadd.xlane.f32.xlu0 %v351
        %v353 = vpop.xlane.xlu0 %352
        %v354 = vrcp.pop 256.0
        %v355 = vmul.f32 %v344, %v354
        %v356 = vmul.f32 %v347, %v354
        %v357 = vmul.f32 %v350, %v354
        %v358 = vmul.f32 %v353, %v354
        %v359 = vadd.f32 %v334, %v335
        %360 = vadd.xlane.f32.xlu0 %v359
        %v361 = vpop.xlane.xlu0 %360
        %v362 = vadd.f32 %v336, %v337
        %363 = vadd.xlane.f32.xlu0 %v362
        %v364 = vpop.xlane.xlu0 %363
        %v365 = vadd.f32 %v338, %v339
        %366 = vadd.xlane.f32.xlu0 %v365
        %v367 = vpop.xlane.xlu0 %366
        %v368 = vadd.f32 %v340, %v341
        %369 = vadd.xlane.f32.xlu0 %v368
        %v370 = vpop.xlane.xlu0 %369
        %v371 = vmul.f32 %v361, %v354
        %v372 = vmul.f32 %v364, %v354
        %v373 = vmul.f32 %v367, %v354
        %v374 = vmul.f32 %v370, %v354
        %v375 = vld [vmem:[#allocation7] sm:$0xff]
        %v376 = vld [vmem:[#allocation7 + $0x8] sm:$0xff]
        %v377 = vld [vmem:[#allocation7 + $0x10] sm:$0xff]
        %v378 = vld [vmem:[#allocation7 + $0x18] sm:$0xff]
        %vm379 = vcmask 261120
        %v381 = vsel %vm379, %v375, 0
        %v384 = vsel %vm379, %v376, 0
        %v387 = vsel %vm379, %v377, 0
        %v390 = vsel %vm379, %v378, 0
        %392 = vmatprep.subr.mxu0 0.0
        %393 = vmatpush1.msra.mxu0 %v355
        %394 = vmatprep.subr.mxu0 0.0
        %395 = vmatpush1.msra.mxu0 %v356
        %396 = vmatprep.subr.mxu0 0.0
        %397 = vmatpush1.msra.mxu0 %v357
        %398 = vmatprep.subr.mxu0 0.0
        %399 = vmatpush1.msra.mxu0 %v358
        %400 = vmatprep.subr.mxu0 0.0
        %401 = vmatpush1.msra.mxu0 0.0
        %402 = vmatprep.subr.mxu0 0.0
        %403 = vmatpush1.msra.mxu0 0.0
        %404 = vmatprep.subr.mxu0 0.0
        %405 = vmatpush1.msra.mxu0 0.0
        %406 = vmatprep.subr.mxu0 0.0
        %407 = vmatpush1.msra.mxu0 0.0
        %408 = vmatprep.subr.mxu0 0.0
        %409 = vmatpush1.msra.mxu0 0.0
        %410 = vmatprep.subr.mxu0 0.0
        %411 = vmatpush1.msra.mxu0 0.0
        %412 = vmatprep.subr.mxu0 0.0
        %413 = vmatpush1.msra.mxu0 0.0
        %414 = vmatprep.subr.mxu0 0.0
        %415 = vmatpush1.msra.mxu0 0.0
        %416 = vmatprep.subr.mxu0 0.0
        %417 = vmatpush1.msra.mxu0 0.0
        %418 = vmatprep.subr.mxu0 0.0
        %419 = vmatpush1.msra.mxu0 0.0
        %420 = vmatprep.subr.mxu0 0.0
        %421 = vmatpush1.msra.mxu0 0.0
        %422 = vmatprep.subr.mxu0 0.0
        %423 = vmatpush1.msra.mxu0 0.0
        %424 = vmatprep.subr.mxu0 0.0
        %425 = vmatpush1.msra.mxu0 0.0
        %426 = vmatprep.subr.mxu0 0.0
        %427 = vmatpush1.msra.mxu0 0.0
        %428 = vmatprep.subr.mxu0 0.0
        %429 = vmatpush1.msra.mxu0 0.0
        %430 = vmatprep.subr.mxu0 0.0
        %431 = vmatpush1.msra.mxu0 0.0
        %432 = vmatprep.subr.mxu0 0.0
        %433 = vmatpush1.msra.mxu0 0.0
        %434 = vmatprep.subr.mxu0 0.0
        %435 = vmatpush1.msra.mxu0 0.0
        %436 = vmatprep.subr.mxu0 0.0
        %437 = vmatpush1.msra.mxu0 0.0
        %438 = vmatprep.subr.mxu0 0.0
        %439 = vmatpush1.msra.mxu0 0.0
        %440 = vmatprep.subr.mxu0 0.0
        %441 = vmatpush1.msra.mxu0 0.0
        %442 = vmatprep.subr.mxu0 0.0
        %443 = vmatpush1.msra.mxu0 0.0
        %444 = vmatprep.subr.mxu0 0.0
        %445 = vmatpush1.msra.mxu0 0.0
        %446 = vmatprep.subr.mxu0 0.0
        %447 = vmatpush1.msra.mxu0 0.0
        %448 = vmatprep.subr.mxu0 0.0
        %449 = vmatpush1.msra.mxu0 0.0
        %450 = vmatprep.subr.mxu0 0.0
        %451 = vmatpush1.msra.mxu0 0.0
        %452 = vmatprep.subr.mxu0 0.0
        %453 = vmatpush1.msra.mxu0 0.0
        %454 = vmatprep.subr.mxu0 0.0
        %455 = vmatpush1.msra.mxu0 0.0
        %456 = vmatprep.mubr.f32.mxu0 0.0
        %457 = vmatmul.mubr.f32.gmra.mrb[0].mxu0 %v381
        %v458 = vpop.f32.mrb[0].mxu0
        %v459 = vadd.f32 0.0, %v458
        %v460 = vpop.f32.mrb[0].mxu0
        %461 = vmatprep.mubr.f32.mxu0 0.0
        %462 = vmatmul.mubr.f32.gmra.mrb[0].mxu0 %v384
        %v463 = vpop.f32.mrb[0].mxu0
        %v464 = vadd.f32 0.0, %v463
        %v465 = vpop.f32.mrb[0].mxu0
        %466 = vmatprep.mubr.f32.mxu0 0.0
        %467 = vmatmul.mubr.f32.gmra.mrb[0].mxu0 %v387
        %v468 = vpop.f32.mrb[0].mxu0
        %v469 = vadd.f32 0.0, %v468
        %v470 = vpop.f32.mrb[0].mxu0
        %471 = vmatprep.mubr.f32.mxu0 0.0
        %472 = vmatmul.mubr.f32.gmra.mrb[0].mxu0 %v390
        %v473 = vpop.f32.mrb[0].mxu0
        %v474 = vadd.f32 0.0, %v473
        %v475 = vpop.f32.mrb[0].mxu0
        %476 = vdwg.mxu0
        %v477 = vld [vmem:[#allocation8] sm:$0xff]
        %v478 = vld [vmem:[#allocation8 + $0x8] sm:$0xff]
        %v479 = vld [vmem:[#allocation8 + $0x10] sm:$0xff]
        %v480 = vld [vmem:[#allocation8 + $0x18] sm:$0xff]
        %v482 = vsel %vm379, %v477, 0
        %v485 = vsel %vm379, %v478, 0
        %v488 = vsel %vm379, %v479, 0
        %v491 = vsel %vm379, %v480, 0
        %493 = vmatprep.subr.mxu0 0.0
        %494 = vmatpush1.msra.mxu0 %v371
        %495 = vmatprep.subr.mxu0 0.0
        %496 = vmatpush1.msra.mxu0 %v372
        %497 = vmatprep.subr.mxu0 0.0
        %498 = vmatpush1.msra.mxu0 %v373
        %499 = vmatprep.subr.mxu0 0.0
        %500 = vmatpush1.msra.mxu0 %v374
        %501 = vmatprep.subr.mxu0 0.0
        %502 = vmatpush1.msra.mxu0 0.0
        %503 = vmatprep.subr.mxu0 0.0
        %504 = vmatpush1.msra.mxu0 0.0
        %505 = vmatprep.subr.mxu0 0.0
        %506 = vmatpush1.msra.mxu0 0.0
        %507 = vmatprep.subr.mxu0 0.0
        %508 = vmatpush1.msra.mxu0 0.0
        %509 = vmatprep.subr.mxu0 0.0
        %510 = vmatpush1.msra.mxu0 0.0
        %511 = vmatprep.subr.mxu0 0.0
        %512 = vmatpush1.msra.mxu0 0.0
        %513 = vmatprep.subr.mxu0 0.0
        %514 = vmatpush1.msra.mxu0 0.0
        %515 = vmatprep.subr.mxu0 0.0
        %516 = vmatpush1.msra.mxu0 0.0
        %517 = vmatprep.subr.mxu0 0.0
        %518 = vmatpush1.msra.mxu0 0.0
        %519 = vmatprep.subr.mxu0 0.0
        %520 = vmatpush1.msra.mxu0 0.0
        %521 = vmatprep.subr.mxu0 0.0
        %522 = vmatpush1.msra.mxu0 0.0
        %523 = vmatprep.subr.mxu0 0.0
        %524 = vmatpush1.msra.mxu0 0.0
        %525 = vmatprep.subr.mxu0 0.0
        %526 = vmatpush1.msra.mxu0 0.0
        %527 = vmatprep.subr.mxu0 0.0
        %528 = vmatpush1.msra.mxu0 0.0
        %529 = vmatprep.subr.mxu0 0.0
        %530 = vmatpush1.msra.mxu0 0.0
        %531 = vmatprep.subr.mxu0 0.0
        %532 = vmatpush1.msra.mxu0 0.0
        %533 = vmatprep.subr.mxu0 0.0
        %534 = vmatpush1.msra.mxu0 0.0
        %535 = vmatprep.subr.mxu0 0.0
        %536 = vmatpush1.msra.mxu0 0.0
        %537 = vmatprep.subr.mxu0 0.0
        %538 = vmatpush1.msra.mxu0 0.0
        %539 = vmatprep.subr.mxu0 0.0
        %540 = vmatpush1.msra.mxu0 0.0
        %541 = vmatprep.subr.mxu0 0.0
        %542 = vmatpush1.msra.mxu0 0.0
        %543 = vmatprep.subr.mxu0 0.0
        %544 = vmatpush1.msra.mxu0 0.0
        %545 = vmatprep.subr.mxu0 0.0
        %546 = vmatpush1.msra.mxu0 0.0
        %547 = vmatprep.subr.mxu0 0.0
        %548 = vmatpush1.msra.mxu0 0.0
        %549 = vmatprep.subr.mxu0 0.0
        %550 = vmatpush1.msra.mxu0 0.0
        %551 = vmatprep.subr.mxu0 0.0
        %552 = vmatpush1.msra.mxu0 0.0
        %553 = vmatprep.subr.mxu0 0.0
        %554 = vmatpush1.msra.mxu0 0.0
        %555 = vmatprep.subr.mxu0 0.0
        %556 = vmatpush1.msra.mxu0 0.0
        %557 = vmatprep.mubr.f32.mxu0 0.0
        %558 = vmatmul.mubr.f32.gmra.mrb[0].mxu0 %v482
        %v559 = vpop.f32.mrb[0].mxu0
        %v560 = vadd.f32 0.0, %v559
        %v561 = vpop.f32.mrb[0].mxu0
        %562 = vmatprep.mubr.f32.mxu0 0.0
        %563 = vmatmul.mubr.f32.gmra.mrb[0].mxu0 %v485
        %v564 = vpop.f32.mrb[0].mxu0
        %v565 = vadd.f32 0.0, %v564
        %v566 = vpop.f32.mrb[0].mxu0
        %567 = vmatprep.mubr.f32.mxu0 0.0
        %568 = vmatmul.mubr.f32.gmra.mrb[0].mxu0 %v488
        %v569 = vpop.f32.mrb[0].mxu0
        %v570 = vadd.f32 0.0, %v569
        %v571 = vpop.f32.mrb[0].mxu0
        %572 = vmatprep.mubr.f32.mxu0 0.0
        %573 = vmatmul.mubr.f32.gmra.mrb[0].mxu0 %v491
        %v574 = vpop.f32.mrb[0].mxu0
        %v575 = vadd.f32 0.0, %v574
        %v576 = vpop.f32.mrb[0].mxu0
        %577 = vdwg.mxu0
        %v578 = vmul.f32 %v459, %v560
        %v579 = vmul.f32 %v464, %v565
        %v580 = vmul.f32 %v469, %v570
        %v581 = vmul.f32 %v474, %v575
        %vm582 = vcmask 7168
        %v583 = vsel %vm582, %v578, -inf
        %v584 = vsel %vm582, %v579, -inf
        %v585 = vsel %vm582, %v580, -inf
        %v586 = vsel %vm582, %v581, -inf
        %v587 = vmax.f32 %v583, %v584
        %v588 = vmax.f32 %v585, %v586
        %v589 = vmax.f32 %v587, %v588
        %v590 = vrot.slane %v589, 4
        %v591 = vmax.f32 %v589, %v590
        %v592 = vrot.slane %v591, 2
        %v593 = vmax.f32 %v591, %v592
        %v594 = vrot.slane %v593, 1
        %v595 = vmax.f32 %v593, %v594
        %v596 = vsub.f32 %v578, %v595
        %v597 = vsub.f32 %v579, %v595
        %v598 = vsub.f32 %v580, %v595
        %v599 = vsub.f32 %v581, %v595
        %v600 = vmul.f32 %v596, 1.442695
        %v601 = vpow.pop %v600
        %v602 = vmul.f32 %v597, 1.442695
        %v603 = vpow.pop %v602
        %v604 = vmul.f32 %v598, 1.442695
        %v605 = vpow.pop %v604
        %v606 = vmul.f32 %v599, 1.442695
        %v607 = vpow.pop %v606
        %v608 = vsel %vm582, %v601, 0.0
        %v609 = vsel %vm582, %v603, 0.0
        %v610 = vadd.f32 %v608, %v609
        %v611 = vsel %vm582, %v605, 0.0
        %v612 = vadd.f32 %v610, %v611
        %v613 = vsel %vm582, %v607, 0.0
        %v614 = vadd.f32 %v612, %v613
        %v615 = vrot.slane %v614, 4
        %v616 = vadd.f32 %v614, %v615
        %v617 = vrot.slane %v616, 2
        %v618 = vadd.f32 %v616, %v617
        %v619 = vrot.slane %v618, 1
        %v620 = vadd.f32 %v618, %v619
        %v621 = vrcp.pop %v620
        %v622 = vmul.f32 %v601, %v621
        %v623 = vmul.f32 %v603, %v621
        %v624 = vmul.f32 %v605, %v621
        %v625 = vmul.f32 %v607, %v621
        %v626 = vld [vmem:[#allocation10] sm:$0xff]
        %v627 = vld [vmem:[#allocation10 + $0x8] sm:$0xff]
        %v628 = vld [vmem:[#allocation10 + $0x10] sm:$0xff]
        %v629 = vld [vmem:[#allocation10 + $0x18] sm:$0xff]
        %631 = vset.pattern.permute.xlu0 0
        %632 = vperm.xlu0 %631, %v622
        %v633 = vpop.permute.xlu0 %632
        %636 = vset.pattern.permute.xlu0 0
        %637 = vperm.xlu0 %636, %v623
        %v638 = vpop.permute.xlu0 %637
        %641 = vset.pattern.permute.xlu0 0
        %642 = vperm.xlu0 %641, %v624
        %v643 = vpop.permute.xlu0 %642
        %646 = vset.pattern.permute.xlu0 0
        %647 = vperm.xlu0 %646, %v625
        %v648 = vpop.permute.xlu0 %647
        %v650 = vmul.f32 %v633, %v626
        %v651 = vmul.f32 %v638, %v627
        %v652 = vmul.f32 %v643, %v628
        %v653 = vmul.f32 %v648, %v629
        %v655 = vsel %vm379, %v650, 0
        %v658 = vsel %vm379, %v651, 0
        %v661 = vsel %vm379, %v652, 0
        %v664 = vsel %vm379, %v653, 0
        %666 = vmatprep.subr.mxu0 %v327
        %667 = vmatpush1.msra.mxu0 %v326
        %668 = vmatprep.subr.mxu0 %v329
        %669 = vmatpush1.msra.mxu0 %v328
        %670 = vmatprep.subr.mxu0 %v331
        %671 = vmatpush1.msra.mxu0 %v330
        %672 = vmatprep.subr.mxu0 %v333
        %673 = vmatpush1.msra.mxu0 %v332
        %674 = vmatprep.subr.mxu0 0.0
        %675 = vmatpush1.msra.mxu0 0.0
        %676 = vmatprep.subr.mxu0 0.0
        %677 = vmatpush1.msra.mxu0 0.0
        %678 = vmatprep.subr.mxu0 0.0
        %679 = vmatpush1.msra.mxu0 0.0
        %680 = vmatprep.subr.mxu0 0.0
        %681 = vmatpush1.msra.mxu0 0.0
        %682 = vmatprep.subr.mxu0 0.0
        %683 = vmatpush1.msra.mxu0 0.0
        %684 = vmatprep.subr.mxu0 0.0
        %685 = vmatpush1.msra.mxu0 0.0
        %686 = vmatprep.subr.mxu0 0.0
        %687 = vmatpush1.msra.mxu0 0.0
        %688 = vmatprep.subr.mxu0 0.0
        %689 = vmatpush1.msra.mxu0 0.0
        %690 = vmatprep.subr.mxu0 0.0
        %691 = vmatpush1.msra.mxu0 0.0
        %692 = vmatprep.subr.mxu0 0.0
        %693 = vmatpush1.msra.mxu0 0.0
        %694 = vmatprep.subr.mxu0 0.0
        %695 = vmatpush1.msra.mxu0 0.0
        %696 = vmatprep.subr.mxu0 0.0
        %697 = vmatpush1.msra.mxu0 0.0
        %698 = vmatprep.subr.mxu0 0.0
        %699 = vmatpush1.msra.mxu0 0.0
        %700 = vmatprep.subr.mxu0 0.0
        %701 = vmatpush1.msra.mxu0 0.0
        %702 = vmatprep.subr.mxu0 0.0
        %703 = vmatpush1.msra.mxu0 0.0
        %704 = vmatprep.subr.mxu0 0.0
        %705 = vmatpush1.msra.mxu0 0.0
        %706 = vmatprep.subr.mxu0 0.0
        %707 = vmatpush1.msra.mxu0 0.0
        %708 = vmatprep.subr.mxu0 0.0
        %709 = vmatpush1.msra.mxu0 0.0
        %710 = vmatprep.subr.mxu0 0.0
        %711 = vmatpush1.msra.mxu0 0.0
        %712 = vmatprep.subr.mxu0 0.0
        %713 = vmatpush1.msra.mxu0 0.0
        %714 = vmatprep.subr.mxu0 0.0
        %715 = vmatpush1.msra.mxu0 0.0
        %716 = vmatprep.subr.mxu0 0.0
        %717 = vmatpush1.msra.mxu0 0.0
        %718 = vmatprep.subr.mxu0 0.0
        %719 = vmatpush1.msra.mxu0 0.0
        %720 = vmatprep.subr.mxu0 0.0
        %721 = vmatpush1.msra.mxu0 0.0
        %722 = vmatprep.subr.mxu0 0.0
        %723 = vmatpush1.msra.mxu0 0.0
        %724 = vmatprep.subr.mxu0 0.0
        %725 = vmatpush1.msra.mxu0 0.0
        %726 = vmatprep.subr.mxu0 0.0
        %727 = vmatpush1.msra.mxu0 0.0
        %728 = vmatprep.subr.mxu0 0.0
        %729 = vmatpush1.msra.mxu0 0.0
        %730 = vmatprep.mubr.f32.mxu0 0.0
        %731 = vmatmul.mubr.f32.gmra.mrb[0].mxu0 %v655
        %v732 = vpop.f32.mrb[0].mxu0
        %v733 = vadd.f32 0.0, %v732
        %v734 = vpop.f32.mrb[0].mxu0
        %v735 = vadd.f32 0.0, %v734
        %736 = vmatprep.mubr.f32.mxu0 0.0
        %737 = vmatmul.mubr.f32.gmra.mrb[0].mxu0 %v658
        %v738 = vpop.f32.mrb[0].mxu0
        %v739 = vadd.f32 0.0, %v738
        %v740 = vpop.f32.mrb[0].mxu0
        %v741 = vadd.f32 0.0, %v740
        %742 = vmatprep.mubr.f32.mxu0 0.0
        %743 = vmatmul.mubr.f32.gmra.mrb[0].mxu0 %v661
        %v744 = vpop.f32.mrb[0].mxu0
        %v745 = vadd.f32 0.0, %v744
        %v746 = vpop.f32.mrb[0].mxu0
        %v747 = vadd.f32 0.0, %v746
        %748 = vmatprep.mubr.f32.mxu0 0.0
        %749 = vmatmul.mubr.f32.gmra.mrb[0].mxu0 %v664
        %v750 = vpop.f32.mrb[0].mxu0
        %v751 = vadd.f32 0.0, %v750
        %v752 = vpop.f32.mrb[0].mxu0
        %v753 = vadd.f32 0.0, %v752
        %754 = vdwg.mxu0
        %v755 = vadd.f32 %v326, %v733
        %v756 = vadd.f32 %v327, %v735
        %v757 = vadd.f32 %v328, %v739
        %v758 = vadd.f32 %v329, %v741
        %v759 = vadd.f32 %v330, %v745
        %v760 = vadd.f32 %v331, %v747
        %v761 = vadd.f32 %v332, %v751
        %v762 = vadd.f32 %v333, %v753
        %763 = vst [vmem:[%s325] sm:$0xff] %v755
        %764 = vst [vmem:[%s325 + $0x8] sm:$0xff] %v756
        %765 = vst [vmem:[%s325 + $0x10] sm:$0xff] %v757
        %766 = vst [vmem:[%s325 + $0x18] sm:$0xff] %v758
        %767 = vst [vmem:[%s325 + $0x20] sm:$0xff] %v759
        %768 = vst [vmem:[%s325 + $0x28] sm:$0xff] %v760
        %769 = vst [vmem:[%s325 + $0x30] sm:$0xff] %v761
        %770 = vst [vmem:[%s325 + $0x38] sm:$0xff] %v762
        %s771 = sand.u32 %s149, 1
        %s772 = scalar_lea.sflag [#allocation4], %s771
        %s773 = sand.u32 %s149, 1
        %s774 = smul.addr %s773, 64
        %s775 = scalar_lea.vmem [#allocation11], %s774
        // Predicated region
        $region61: #{tpu_custom_call.1} parent=39 // pred_check
          %p776 = pneg %p159
        $region62: #{tpu_custom_call.1} parent=39 // pred_check_branch
          %778 = sbr.rel (%p776) target = $region64
        $region63: #{tpu_custom_call.1} parent=39 // pred_region
          %s780 = ssub.s32 1024, 1024
          %781 = vsyncadd %s772, %s780
          %s782 = smul.addr %s26, 8
          %s783 = smul.addr %s782, 128
          %s784 = scalar_lea.hbm %s5, %s783
          %s785 = sshll.u32 %s775, 4
          %s786 = int_to_ptr.vmem [resolvable:$true] %s785
          %791 = dma.vmem_to_hbm [thread:$0]  %s786, 1024, %s784, %s772, 256, 256, 16
        $region64: #{tpu_custom_call.1} parent=39 // pred_fallthru
          _
      $region40: #{tpu_custom_call.1} parent=5 // pred_fallthru
        _
      %p792 = scmp.le.s32.totalorder 2, %s21
      // Predicated region
      $region65: #{tpu_custom_call.1} parent=5 // pred_check
        %p793 = pneg %p792
      $region66: #{tpu_custom_call.1} parent=5 // pred_check_branch
        %795 = sbr.rel (%p793) target = $region68
      $region67: #{tpu_custom_call.1} parent=5 // pred_region
        %s796 = ssub.s32 %s21, 2
        // Predicated region
        $region69: #{tpu_custom_call.1} parent=67 // pred_check
          %p797 = pneg %p165
        $region70: #{tpu_custom_call.1} parent=67 // pred_check_branch
          %799 = sbr.rel (%p797) target = $region72
        $region71: #{tpu_custom_call.1} parent=67 // pred_region
          %s800 = sand.u32 %s150, 1
          %s801 = scalar_lea.sflag [#allocation4], %s800
          %s802 = sand.u32 %s150, 1
          %s803 = smul.addr %s802, 64
          %s804 = scalar_lea.vmem [#allocation11], %s803
          %805 = dma.done %s801, 1024
        $region72: #{tpu_custom_call.1} parent=67 // pred_fallthru
          _
      $region68: #{tpu_custom_call.1} parent=5 // pred_fallthru
        _
    $region6: #{tpu_custom_call.1} parent=1 // loop_footer
      %s25 = sadd.s32 1, %s21
    $region7: #{tpu_custom_call.1} parent=1 // loop_footer_branch
      %20 = sbr.rel target = $region3
    $region8: #{tpu_custom_call.1} parent=1 // loop_exit
      _
    %806 = vsyncpa [#allocation3], 1
    %s807 = scalar_lea.sflag [#allocation3], 1
    %808 = vsyncpa %s807, 1
    %809 = vsyncpa [#allocation6], 1
    %s810 = scalar_lea.sflag [#allocation6], 1
    %811 = vsyncpa %s810, 1
    %812 = vsyncpa [#allocation9], 1
    %813 = vsyncpa [#allocation4], 1
    %s814 = scalar_lea.sflag [#allocation4], 1
    %815 = vsyncpa %s814, 1

</llo_original>
